<compile_context>
chip_gen: v7x
topology: tpu7x:2x2x1
jax: 0.10.0
libtpu: 0.0.40
codegen_flags: <defaults>
</compile_context>

<pallas_src>
import functools

import jax
import jax.numpy as jnp
from jax.experimental import pallas as pl
from jax.experimental.pallas import tpu as pltpu


def fusion_cat_kernel(xt_ref, xv_ref, wt_ref, wv_ref, b_ref, o_ref, *,
                      precision=None):
    """Blocks: xt/xv (N_TILE, C, TILE_L); wt/wv (C_out, C); b (C_out, 1);
    o (N_TILE, C_out, TILE_L).  Contraction over the (tiny) channel dim keeps
    spatial on lanes -> lane-dense output stores."""
    wt = wt_ref[...]
    wv = wv_ref[...]
    b = b_ref[...]                              # (C_out, 1), broadcasts on lanes
    n_tile = xt_ref.shape[0]
    for i in range(n_tile):                     # small, static batch fold
        acc = jnp.dot(wt, xt_ref[i],
                      preferred_element_type=jnp.float32, precision=precision)
        acc = acc + jnp.dot(wv, xv_ref[i],
                            preferred_element_type=jnp.float32,
                            precision=precision)
        o_ref[i] = (acc + b).astype(o_ref.dtype)


def _vmem_capacity_bytes():
    """Per-generation physical VMEM (v5e/v6e: 128 MiB, v7x: 64 MiB/TC).
    Conservative fallback if the query is unavailable."""
    try:
        info = pltpu.get_tpu_info()
        cap = getattr(info, "vmem_capacity_bytes", None)
        if cap:
            return int(cap)
    except Exception:
        pass
    return 64 * 1024 * 1024


def _largest_div128(hw_pad, cap_lanes):
    """Largest multiple of 128 that divides hw_pad (itself a 128-multiple) and
    is <= cap_lanes (at least 128)."""
    t = max(128, (min(cap_lanes, hw_pad) // 128) * 128)
    while hw_pad % t != 0:
        t -= 128
    return t


def _plan_tiles(N, C, C_out, HW_pad, in_bytes, out_bytes, vmem_capacity):
    """Pick (n_tile, tile_l) from a VMEM byte budget (mem-bound kernel: move as
    many bytes per grid step as safely fits, double-buffered)."""
    pad8 = lambda c: max(8, ((c + 7) // 8) * 8)      # f32/bf16 sublane padding
    c_in_p, c_out_p = pad8(C), pad8(C_out)
    # HBM<->VMEM bytes per lane per folded image per step (2 inputs + 1 output).
    bytes_per_lane_n = 2 * c_in_p * in_bytes + c_out_p * out_bytes

    # Double-buffered working set must stay well under physical VMEM.
    step_budget = max(1 << 20, vmem_capacity // 6)

    # Fold batch images per step (amortizes ~0.35us per-step overhead).
    n_tile = N
    while n_tile > 1 and (N % n_tile != 0
                          or n_tile * bytes_per_lane_n * 128 > step_budget):
        n_tile -= 1

    # Lane tile: largest 128-multiple divisor of HW_pad within the budget.
    cap_lanes = step_budget // (n_tile * bytes_per_lane_n)
    tile_l = _largest_div128(HW_pad, cap_lanes)

    # Megacore (v7x): prefer >=2 grid steps when each step still moves >=1 MiB.
    total_steps = (N // n_tile) * (HW_pad // tile_l)
    if total_steps == 1:
        if (n_tile % 2 == 0
                and (n_tile // 2) * bytes_per_lane_n * tile_l >= (1 << 20)):
            n_tile //= 2
        elif HW_pad // 128 >= 2:
            half = _largest_div128(HW_pad, max(128, tile_l // 2))
            if half < tile_l and n_tile * bytes_per_lane_n * half >= (1 << 20):
                tile_l = half

    return n_tile, tile_l, c_in_p, c_out_p


def fusion_cat_forward(feat_t, feat_v, weight, bias, *,
                       compute_dtype=None, precision=None):
    """feat_t, feat_v: (N, C, H, W).  weight: (C_out, 2C, 1, 1) PyTorch Conv2d
    layout.  bias: (C_out,).  compute_dtype=jnp.bfloat16 halves HBM traffic if
    the model tolerates it (accumulation stays f32); default keeps f32."""
    N, C, H, W = feat_t.shape
    C_out = weight.shape[0]
    HW = H * W
    out_dtype = feat_t.dtype
    out_bytes = jnp.dtype(out_dtype).itemsize

    # Pure reshapes — no transposes, no extra HBM round trips.
    xt = feat_t.reshape(N, C, HW)
    xv = feat_v.reshape(N, C, HW)

    # Conv weight (C_out, 2C, 1, 1) -> per-branch matmul weights (C_out, C).
    w2d = weight[:, :, 0, 0]
    w_t = w2d[:, :C]
    w_v = w2d[:, C:]
    b = bias.reshape(C_out, 1).astype(jnp.float32)

    if compute_dtype is not None:
        cd = jnp.dtype(compute_dtype)
        xt, xv = xt.astype(cd), xv.astype(cd)
        w_t, w_v = w_t.astype(cd), w_v.astype(cd)
    in_bytes = jnp.dtype(xt.dtype).itemsize

    # Always present a lane-dense (128-multiple) last dim: pad, slice after.
    HW_pad = ((HW + 127) // 128) * 128
    if HW_pad != HW:
        pad = HW_pad - HW
        xt = jnp.pad(xt, ((0, 0), (0, 0), (0, pad)))
        xv = jnp.pad(xv, ((0, 0), (0, 0), (0, pad)))

    vmem_capacity = _vmem_capacity_bytes()
    n_tile, tile_l, c_in_p, c_out_p = _plan_tiles(
        N, C, C_out, HW_pad, in_bytes, out_bytes, vmem_capacity)

    grid = (N // n_tile, HW_pad // tile_l)

    # Explicit scoped-VMEM limit: double-buffered step working set + headroom,
    # capped below physical capacity (v7x: 64 MiB).
    step_bytes = n_tile * tile_l * (2 * c_in_p * in_bytes + c_out_p * out_bytes)
    vmem_limit = int(min(int(vmem_capacity * 0.85),
                         max(32 << 20, 2 * step_bytes + (4 << 20))))

    cost = pl.CostEstimate(
        flops=4 * N * C_out * C * HW_pad,
        transcendentals=0,
        bytes_accessed=(2 * N * C * HW_pad) * in_bytes
                       + (N * C_out * HW_pad) * out_bytes
                       + 2 * C_out * C * in_bytes + C_out * 4,
    )

    out = pl.pallas_call(
        functools.partial(fusion_cat_kernel, precision=precision),
        out_shape=jax.ShapeDtypeStruct((N, C_out, HW_pad), out_dtype),
        grid=grid,
        in_specs=[
            pl.BlockSpec((n_tile, C, tile_l), lambda n, l: (n, 0, l)),
            pl.BlockSpec((n_tile, C, tile_l), lambda n, l: (n, 0, l)),
            pl.BlockSpec((C_out, C), lambda n, l: (0, 0)),
            pl.BlockSpec((C_out, C), lambda n, l: (0, 0)),
            pl.BlockSpec((C_out, 1), lambda n, l: (0, 0)),
        ],
        out_specs=pl.BlockSpec((n_tile, C_out, tile_l), lambda n, l: (n, 0, l)),
        compiler_params=pltpu.CompilerParams(
            dimension_semantics=("parallel", "parallel"),
            vmem_limit_bytes=vmem_limit,
        ),
        cost_estimate=cost,
    )(xt, xv, w_t, w_v, b)

    if HW_pad != HW:
        out = out[:, :, :HW]
    # (N, C_out, H*W) -> (N, C_out, H, W): contiguous reshape, no transpose.
    return out.reshape(N, C_out, H, W)


if __name__ == "__main__":
    key = jax.random.PRNGKey(0)
    k1, k2, k3, k4 = jax.random.split(key, 4)

    N, C, H, W = 2, 4, 16, 16

    feat_t = jax.random.normal(k1, (N, C, H, W), dtype=jnp.float32)
    feat_v = jax.random.normal(k2, (N, C, H, W), dtype=jnp.float32)

    # Deterministic conv params: Conv2d(2C -> C, kernel_size=1)
    weight = jax.random.normal(k3, (C, 2 * C, 1, 1), dtype=jnp.float32) * 0.1
    bias = jax.random.normal(k4, (C,), dtype=jnp.float32) * 0.1

    out = fusion_cat_forward(feat_t, feat_v, weight, bias)
    out = jax.block_until_ready(out)

    # Reference check against plain-JAX 1x1 conv on the channel concat.
    x_cat = jnp.concatenate([feat_t, feat_v], axis=1)          # (N, 2C, H, W)
    w2d = weight[:, :, 0, 0]                                    # (C, 2C)
    ref = jnp.einsum("nchw,oc->nohw", x_cat, w2d) + bias[None, :, None, None]
    assert out.shape == (N, C, H, W)
    assert jnp.allclose(out, ref, atol=1e-5, rtol=1e-5)

    print("KERNEL_OK")
</pallas_src>

<mosaic_0001>
module attributes {stable_mosaic.version = 11 : i64} {
  func.func @fusion_cat_kernel(%arg0: i32, %arg1: i32, %arg2: memref<2x4x256xf32, #tpu.memory_space<vmem>>, %arg3: memref<2x4x256xf32, #tpu.memory_space<vmem>>, %arg4: memref<4x4xf32, #tpu.memory_space<vmem>>, %arg5: memref<4x4xf32, #tpu.memory_space<vmem>>, %arg6: memref<4x1xf32, #tpu.memory_space<vmem>>, %arg7: memref<2x4x256xf32, #tpu.memory_space<vmem>>) attributes {dimension_semantics = [#tpu.dimension_semantics<parallel>, #tpu.dimension_semantics<parallel>], iteration_bounds = array<i64: 1, 1>, scalar_prefetch = 0 : i64, scratch_operands = 0 : i64, tpu.core_type = #tpu.core_type<tc>, window_params = [{transform_indices = @transform_0, window_bounds = array<i64: 2, 4, 256>}, {transform_indices = @transform_1, window_bounds = array<i64: 2, 4, 256>}, {pipeline_mode = #tpu.pipeline_mode<synchronous>, transform_indices = @transform_2, window_bounds = array<i64: 4, 4>}, {pipeline_mode = #tpu.pipeline_mode<synchronous>, transform_indices = @transform_3, window_bounds = array<i64: 4, 4>}, {pipeline_mode = #tpu.pipeline_mode<synchronous>, transform_indices = @transform_4, window_bounds = array<i64: 4, 1>}, {transform_indices = @transform_5, window_bounds = array<i64: 2, 4, 256>}]} {
    %c0 = arith.constant 0 : index
    %c0_0 = arith.constant 0 : index
    %0 = vector.load %arg4[%c0, %c0_0] : memref<4x4xf32, #tpu.memory_space<vmem>>, vector<4x4xf32>
    %c0_1 = arith.constant 0 : index
    %c0_2 = arith.constant 0 : index
    %1 = vector.load %arg5[%c0_1, %c0_2] : memref<4x4xf32, #tpu.memory_space<vmem>>, vector<4x4xf32>
    %c0_3 = arith.constant 0 : index
    %c0_4 = arith.constant 0 : index
    %2 = vector.load %arg6[%c0_3, %c0_4] : memref<4x1xf32, #tpu.memory_space<vmem>>, vector<4x1xf32>
    %c0_5 = arith.constant 0 : index
    %c0_6 = arith.constant 0 : index
    %c0_7 = arith.constant 0 : index
    %3 = vector.load %arg2[%c0_5, %c0_6, %c0_7] : memref<2x4x256xf32, #tpu.memory_space<vmem>>, vector<1x4x256xf32>
    %4 = vector.shape_cast %3 : vector<1x4x256xf32> to vector<4x256xf32>
    %cst = arith.constant dense<0.000000e+00> : vector<4x256xf32>
    %5 = tpu.matmul %0, %4, %cst {dimension_numbers = #tpu.dot_dimension_numbers<[1], [0], [0], [1], [0, 0, 1, 1], [], []>} : vector<4x4xf32>, vector<4x256xf32>, vector<4x256xf32> -> vector<4x256xf32>
    %c0_8 = arith.constant 0 : index
    %c0_9 = arith.constant 0 : index
    %c0_10 = arith.constant 0 : index
    %6 = vector.load %arg3[%c0_8, %c0_9, %c0_10] : memref<2x4x256xf32, #tpu.memory_space<vmem>>, vector<1x4x256xf32>
    %7 = vector.shape_cast %6 : vector<1x4x256xf32> to vector<4x256xf32>
    %cst_11 = arith.constant dense<0.000000e+00> : vector<4x256xf32>
    %8 = tpu.matmul %1, %7, %cst_11 {dimension_numbers = #tpu.dot_dimension_numbers<[1], [0], [0], [1], [0, 0, 1, 1], [], []>} : vector<4x4xf32>, vector<4x256xf32>, vector<4x256xf32> -> vector<4x256xf32>
    %9 = arith.addf %5, %8 : vector<4x256xf32>
    %10 = vector.broadcast %2 : vector<4x1xf32> to vector<4x256xf32>
    %11 = arith.addf %9, %10 : vector<4x256xf32>
    %c0_12 = arith.constant 0 : index
    %c0_13 = arith.constant 0 : index
    %c0_14 = arith.constant 0 : index
    %12 = vector.load %arg7[%c0_12, %c0_13, %c0_14] : memref<2x4x256xf32, #tpu.memory_space<vmem>>, vector<1x4x256xf32>
    %13 = vector.shape_cast %12 : vector<1x4x256xf32> to vector<4x256xf32>
    %14 = vector.shape_cast %11 : vector<4x256xf32> to vector<1x4x256xf32>
    tpu.vector_store %arg7[%c0_12, %c0_13, %c0_14], %14 {strides = array<i32>} : memref<2x4x256xf32, #tpu.memory_space<vmem>>, vector<1x4x256xf32>,
    %c1 = arith.constant 1 : index
    %c0_15 = arith.constant 0 : index
    %c0_16 = arith.constant 0 : index
    %15 = vector.load %arg2[%c1, %c0_15, %c0_16] : memref<2x4x256xf32, #tpu.memory_space<vmem>>, vector<1x4x256xf32>
    %16 = vector.shape_cast %15 : vector<1x4x256xf32> to vector<4x256xf32>
    %cst_17 = arith.constant dense<0.000000e+00> : vector<4x256xf32>
    %17 = tpu.matmul %0, %16, %cst_17 {dimension_numbers = #tpu.dot_dimension_numbers<[1], [0], [0], [1], [0, 0, 1, 1], [], []>} : vector<4x4xf32>, vector<4x256xf32>, vector<4x256xf32> -> vector<4x256xf32>
    %c1_18 = arith.constant 1 : index
    %c0_19 = arith.constant 0 : index
    %c0_20 = arith.constant 0 : index
    %18 = vector.load %arg3[%c1_18, %c0_19, %c0_20] : memref<2x4x256xf32, #tpu.memory_space<vmem>>, vector<1x4x256xf32>
    %19 = vector.shape_cast %18 : vector<1x4x256xf32> to vector<4x256xf32>
    %cst_21 = arith.constant dense<0.000000e+00> : vector<4x256xf32>
    %20 = tpu.matmul %1, %19, %cst_21 {dimension_numbers = #tpu.dot_dimension_numbers<[1], [0], [0], [1], [0, 0, 1, 1], [], []>} : vector<4x4xf32>, vector<4x256xf32>, vector<4x256xf32> -> vector<4x256xf32>
    %21 = arith.addf %17, %20 : vector<4x256xf32>
    %22 = vector.broadcast %2 : vector<4x1xf32> to vector<4x256xf32>
    %23 = arith.addf %21, %22 : vector<4x256xf32>
    %c1_22 = arith.constant 1 : index
    %c0_23 = arith.constant 0 : index
    %c0_24 = arith.constant 0 : index
    %24 = vector.load %arg7[%c1_22, %c0_23, %c0_24] : memref<2x4x256xf32, #tpu.memory_space<vmem>>, vector<1x4x256xf32>
    %25 = vector.shape_cast %24 : vector<1x4x256xf32> to vector<4x256xf32>
    %26 = vector.shape_cast %23 : vector<4x256xf32> to vector<1x4x256xf32>
    tpu.vector_store %arg7[%c1_22, %c0_23, %c0_24], %26 {strides = array<i32>} : memref<2x4x256xf32, #tpu.memory_space<vmem>>, vector<1x4x256xf32>,
    return
  }
  func.func @transform_0(%arg0: i32, %arg1: i32) -> (i32, i32, i32) {
    %c0_i32 = arith.constant 0 : i32
    %c0_i32_0 = arith.constant 0 : i32
    return %arg0, %c0_i32, %arg1 : i32, i32, i32
  }
  func.func @transform_1(%arg0: i32, %arg1: i32) -> (i32, i32, i32) {
    %c0_i32 = arith.constant 0 : i32
    %c0_i32_0 = arith.constant 0 : i32
    return %arg0, %c0_i32, %arg1 : i32, i32, i32
  }
  func.func @transform_2(%arg0: i32, %arg1: i32) -> (i32, i32) {
    %c0_i32 = arith.constant 0 : i32
    %c0_i32_0 = arith.constant 0 : i32
    %c0_i32_1 = arith.constant 0 : i32
    return %c0_i32, %c0_i32_0 : i32, i32
  }
  func.func @transform_3(%arg0: i32, %arg1: i32) -> (i32, i32) {
    %c0_i32 = arith.constant 0 : i32
    %c0_i32_0 = arith.constant 0 : i32
    %c0_i32_1 = arith.constant 0 : i32
    return %c0_i32, %c0_i32_0 : i32, i32
  }
  func.func @transform_4(%arg0: i32, %arg1: i32) -> (i32, i32) {
    %c0_i32 = arith.constant 0 : i32
    %c0_i32_0 = arith.constant 0 : i32
    %c0_i32_1 = arith.constant 0 : i32
    return %c0_i32, %c0_i32_0 : i32, i32
  }
  func.func @transform_5(%arg0: i32, %arg1: i32) -> (i32, i32, i32) {
    %c0_i32 = arith.constant 0 : i32
    %c0_i32_0 = arith.constant 0 : i32
    return %arg0, %c0_i32, %arg1 : i32, i32, i32
  }
}

</mosaic_0001>

<llo_original>
// kernel: tpu_custom_call.1
$region0: #{tpu_custom_call.1}
  #allocation0 [shape = 'u32[]', space=smem, size = 0x4, offset = 0x4, fixed_abs, tag = 'smem constant byte address 0x4 - core index']
  #allocation1 [shape = 'u32[144,128]{1,0:T(1,128)}', space=vmem, size = 0x12000, scoped, tag = 'internal scratch']
  %s0 = inlined_call_operand.hbm [shape: f32[2,4,256], index: 0, kind: input, shape index: {}]
  %s1 = inlined_call_operand.hbm [shape: f32[2,4,256], index: 1, kind: input, shape index: {}]
  %s2 = inlined_call_operand.vmem [shape: f32[4,4], index: 2, kind: input, shape index: {}]
  %s3 = inlined_call_operand.vmem [shape: f32[4,4], index: 3, kind: input, shape index: {}]
  %s4 = inlined_call_operand.vmem [shape: f32[4,1], index: 4, kind: input, shape index: {}]
  %s5 = inlined_call_operand.hbm [shape: f32[2,4,256], index: 5, kind: output, shape index: {}]
  %s6 = sld [smem:[#allocation0]]
  $region38: #{tpu_custom_call.1} parent=0
    _
  %s8 = ssub.s32 1, %s6
  %s9 = scalar_select 0, %s8, %s6
  $region1: #{tpu_custom_call.1} parent=0
    #allocation2 [shape = 'u8[8192]{0}', space=vmem, size = 0x2000, scoped, tag = 'input window, operand 0, single buffered']
    #allocation3 [shape = 's32[1]{0}', space=sflag, size = 0x4, scoped, tag = 'scoped memory for tpu_custom_call.1']
    #allocation4 [shape = 's32[1]{0}', space=sflag, size = 0x4, scoped, tag = 'scoped memory for tpu_custom_call.1']
    #allocation5 [shape = 'u8[8192]{0}', space=vmem, size = 0x2000, scoped, tag = 'input window, operand 1, single buffered']
    #allocation6 [shape = 's32[1]{0}', space=sflag, size = 0x4, scoped, tag = 'scoped memory for tpu_custom_call.1']
    #allocation7 [shape = 'u8[8192]{0}', space=vmem, size = 0x2000, scoped, tag = 'output window, operand 0, single buffered']
    %10 = vsyncpa [#allocation3], 0
    %11 = vsyncpa [#allocation6], 0
    %12 = vsyncpa [#allocation4], 0
    // Predicated region
    $region2: #{tpu_custom_call.1} parent=1 // pred_check
      _
    $region3: #{tpu_custom_call.1} parent=1 // pred_check_branch
      %14 = sbr.rel (0) target = $region5
    $region4: #{tpu_custom_call.1} parent=1 // pred_region
      %s16 = ssub.s32 256, 256
      %17 = vsyncadd [#allocation3], %s16
      %s18 = sshll.u32 [#allocation2], 4
      %s19 = int_to_ptr.vmem [resolvable:$true] %s18
      %24 = dma.hbm_to_vmem [thread:$0]  %s0, 256, %s19, [#allocation3], 128, 128, 8
    $region5: #{tpu_custom_call.1} parent=1 // pred_fallthru
      _
    // Predicated region
    $region6: #{tpu_custom_call.1} parent=1 // pred_check
      _
    $region7: #{tpu_custom_call.1} parent=1 // pred_check_branch
      %26 = sbr.rel (0) target = $region9
    $region8: #{tpu_custom_call.1} parent=1 // pred_region
      %s28 = ssub.s32 256, 256
      %29 = vsyncadd [#allocation6], %s28
      %s30 = sshll.u32 [#allocation5], 4
      %s31 = int_to_ptr.vmem [resolvable:$true] %s30
      %36 = dma.hbm_to_vmem [thread:$0]  %s1, 256, %s31, [#allocation6], 128, 128, 8
    $region9: #{tpu_custom_call.1} parent=1 // pred_fallthru
      _
    // Predicated region
    $region10: #{tpu_custom_call.1} parent=1 // pred_check
      _
    $region11: #{tpu_custom_call.1} parent=1 // pred_check_branch
      %38 = sbr.rel (0) target = $region13
    $region12: #{tpu_custom_call.1} parent=1 // pred_region
      _
    $region13: #{tpu_custom_call.1} parent=1 // pred_fallthru
      _
    // Predicated region
    $region14: #{tpu_custom_call.1} parent=1 // pred_check
      _
    $region15: #{tpu_custom_call.1} parent=1 // pred_check_branch
      %40 = sbr.rel (0) target = $region17
    $region16: #{tpu_custom_call.1} parent=1 // pred_region
      _
    $region17: #{tpu_custom_call.1} parent=1 // pred_fallthru
      _
    // Predicated region
    $region18: #{tpu_custom_call.1} parent=1 // pred_check
      _
    $region19: #{tpu_custom_call.1} parent=1 // pred_check_branch
      %42 = sbr.rel (0) target = $region21
    $region20: #{tpu_custom_call.1} parent=1 // pred_region
      _
    $region21: #{tpu_custom_call.1} parent=1 // pred_fallthru
      _
    // Predicated region
    $region22: #{tpu_custom_call.1} parent=1 // pred_check
      _
    $region23: #{tpu_custom_call.1} parent=1 // pred_check_branch
      %44 = sbr.rel (0) target = $region25
    $region24: #{tpu_custom_call.1} parent=1 // pred_region
      %45 = dma.done [#allocation3], 256
    $region25: #{tpu_custom_call.1} parent=1 // pred_fallthru
      _
    // Predicated region
    $region26: #{tpu_custom_call.1} parent=1 // pred_check
      _
    $region27: #{tpu_custom_call.1} parent=1 // pred_check_branch
      %47 = sbr.rel (0) target = $region29
    $region28: #{tpu_custom_call.1} parent=1 // pred_region
      %48 = dma.done [#allocation6], 256
    $region29: #{tpu_custom_call.1} parent=1 // pred_fallthru
      _
    %v49 = vld [vmem:[%s2] sm:$0xf]
    %v50 = vld [vmem:[%s3] sm:$0xf]
    %v51 = vld [vmem:[%s4] sm:$0xf]
    %v52 = vld [vmem:[#allocation2] sm:$0xff]
    %v53 = vld [vmem:[#allocation5] sm:$0xff]
    %v55 = vcombine.high %v53, %v53
    %vm56 = vcmask 31744
    %v58 = vsel %vm56, %v50, 0
    %vm60 = vcmask 1043456
    %v61 = vsel %vm60, %v53, 0
    %v63 = vsel %vm60, %v55, 0
    %65 = vmatprep.subr.mxu0 %v63
    %66 = vmatpush1.msra.mxu0 %v61
    %67 = vmatprep.subr.mxu0 0.0
    %68 = vmatpush1.msra.mxu0 0.0
    %69 = vmatprep.subr.mxu0 0.0
    %70 = vmatpush1.msra.mxu0 0.0
    %71 = vmatprep.subr.mxu0 0.0
    %72 = vmatpush1.msra.mxu0 0.0
    %73 = vmatprep.subr.mxu0 0.0
    %74 = vmatpush1.msra.mxu0 0.0
    %75 = vmatprep.subr.mxu0 0.0
    %76 = vmatpush1.msra.mxu0 0.0
    %77 = vmatprep.subr.mxu0 0.0
    %78 = vmatpush1.msra.mxu0 0.0
    %79 = vmatprep.subr.mxu0 0.0
    %80 = vmatpush1.msra.mxu0 0.0
    %81 = vmatprep.subr.mxu0 0.0
    %82 = vmatpush1.msra.mxu0 0.0
    %83 = vmatprep.subr.mxu0 0.0
    %84 = vmatpush1.msra.mxu0 0.0
    %85 = vmatprep.subr.mxu0 0.0
    %86 = vmatpush1.msra.mxu0 0.0
    %87 = vmatprep.subr.mxu0 0.0
    %88 = vmatpush1.msra.mxu0 0.0
    %89 = vmatprep.subr.mxu0 0.0
    %90 = vmatpush1.msra.mxu0 0.0
    %91 = vmatprep.subr.mxu0 0.0
    %92 = vmatpush1.msra.mxu0 0.0
    %93 = vmatprep.subr.mxu0 0.0
    %94 = vmatpush1.msra.mxu0 0.0
    %95 = vmatprep.subr.mxu0 0.0
    %96 = vmatpush1.msra.mxu0 0.0
    %97 = vmatprep.subr.mxu0 0.0
    %98 = vmatpush1.msra.mxu0 0.0
    %99 = vmatprep.subr.mxu0 0.0
    %100 = vmatpush1.msra.mxu0 0.0
    %101 = vmatprep.subr.mxu0 0.0
    %102 = vmatpush1.msra.mxu0 0.0
    %103 = vmatprep.subr.mxu0 0.0
    %104 = vmatpush1.msra.mxu0 0.0
    %105 = vmatprep.subr.mxu0 0.0
    %106 = vmatpush1.msra.mxu0 0.0
    %107 = vmatprep.subr.mxu0 0.0
    %108 = vmatpush1.msra.mxu0 0.0
    %109 = vmatprep.subr.mxu0 0.0
    %110 = vmatpush1.msra.mxu0 0.0
    %111 = vmatprep.subr.mxu0 0.0
    %112 = vmatpush1.msra.mxu0 0.0
    %113 = vmatprep.subr.mxu0 0.0
    %114 = vmatpush1.msra.mxu0 0.0
    %115 = vmatprep.subr.mxu0 0.0
    %116 = vmatpush1.msra.mxu0 0.0
    %117 = vmatprep.subr.mxu0 0.0
    %118 = vmatpush1.msra.mxu0 0.0
    %119 = vmatprep.subr.mxu0 0.0
    %120 = vmatpush1.msra.mxu0 0.0
    %121 = vmatprep.subr.mxu0 0.0
    %122 = vmatpush1.msra.mxu0 0.0
    %123 = vmatprep.subr.mxu0 0.0
    %124 = vmatpush1.msra.mxu0 0.0
    %125 = vmatprep.subr.mxu0 0.0
    %126 = vmatpush1.msra.mxu0 0.0
    %127 = vmatprep.subr.mxu0 0.0
    %128 = vmatpush1.msra.mxu0 0.0
    %129 = vmatprep.mubr.f32.mxu0 0.0
    %130 = vmatmul.mubr.f32.gmra.mrb[0].mxu0 %v58
    %v131 = vpop.f32.mrb[0].mxu0
    %v132 = vadd.f32 0.0, %v131
    %v133 = vpop.f32.mrb[0].mxu0
    %v134 = vadd.f32 0.0, %v133
    %135 = vdwg.mxu0
    %v137 = vcombine.high %v52, %v52
    %v139 = vsel %vm56, %v49, 0
    %v141 = vsel %vm60, %v52, 0
    %v143 = vsel %vm60, %v137, 0
    %145 = vmatprep.subr.mxu0 %v143
    %146 = vmatpush1.msra.mxu0 %v141
    %147 = vmatprep.subr.mxu0 0.0
    %148 = vmatpush1.msra.mxu0 0.0
    %149 = vmatprep.subr.mxu0 0.0
    %150 = vmatpush1.msra.mxu0 0.0
    %151 = vmatprep.subr.mxu0 0.0
    %152 = vmatpush1.msra.mxu0 0.0
    %153 = vmatprep.subr.mxu0 0.0
    %154 = vmatpush1.msra.mxu0 0.0
    %155 = vmatprep.subr.mxu0 0.0
    %156 = vmatpush1.msra.mxu0 0.0
    %157 = vmatprep.subr.mxu0 0.0
    %158 = vmatpush1.msra.mxu0 0.0
    %159 = vmatprep.subr.mxu0 0.0
    %160 = vmatpush1.msra.mxu0 0.0
    %161 = vmatprep.subr.mxu0 0.0
    %162 = vmatpush1.msra.mxu0 0.0
    %163 = vmatprep.subr.mxu0 0.0
    %164 = vmatpush1.msra.mxu0 0.0
    %165 = vmatprep.subr.mxu0 0.0
    %166 = vmatpush1.msra.mxu0 0.0
    %167 = vmatprep.subr.mxu0 0.0
    %168 = vmatpush1.msra.mxu0 0.0
    %169 = vmatprep.subr.mxu0 0.0
    %170 = vmatpush1.msra.mxu0 0.0
    %171 = vmatprep.subr.mxu0 0.0
    %172 = vmatpush1.msra.mxu0 0.0
    %173 = vmatprep.subr.mxu0 0.0
    %174 = vmatpush1.msra.mxu0 0.0
    %175 = vmatprep.subr.mxu0 0.0
    %176 = vmatpush1.msra.mxu0 0.0
    %177 = vmatprep.subr.mxu0 0.0
    %178 = vmatpush1.msra.mxu0 0.0
    %179 = vmatprep.subr.mxu0 0.0
    %180 = vmatpush1.msra.mxu0 0.0
    %181 = vmatprep.subr.mxu0 0.0
    %182 = vmatpush1.msra.mxu0 0.0
    %183 = vmatprep.subr.mxu0 0.0
    %184 = vmatpush1.msra.mxu0 0.0
    %185 = vmatprep.subr.mxu0 0.0
    %186 = vmatpush1.msra.mxu0 0.0
    %187 = vmatprep.subr.mxu0 0.0
    %188 = vmatpush1.msra.mxu0 0.0
    %189 = vmatprep.subr.mxu0 0.0
    %190 = vmatpush1.msra.mxu0 0.0
    %191 = vmatprep.subr.mxu0 0.0
    %192 = vmatpush1.msra.mxu0 0.0
    %193 = vmatprep.subr.mxu0 0.0
    %194 = vmatpush1.msra.mxu0 0.0
    %195 = vmatprep.subr.mxu0 0.0
    %196 = vmatpush1.msra.mxu0 0.0
    %197 = vmatprep.subr.mxu0 0.0
    %198 = vmatpush1.msra.mxu0 0.0
    %199 = vmatprep.subr.mxu0 0.0
    %200 = vmatpush1.msra.mxu0 0.0
    %201 = vmatprep.subr.mxu0 0.0
    %202 = vmatpush1.msra.mxu0 0.0
    %203 = vmatprep.subr.mxu0 0.0
    %204 = vmatpush1.msra.mxu0 0.0
    %205 = vmatprep.subr.mxu0 0.0
    %206 = vmatpush1.msra.mxu0 0.0
    %207 = vmatprep.subr.mxu0 0.0
    %208 = vmatpush1.msra.mxu0 0.0
    %209 = vmatprep.mubr.f32.mxu0 0.0
    %210 = vmatmul.mubr.f32.gmra.mrb[0].mxu0 %v139
    %v211 = vpop.f32.mrb[0].mxu0
    %v212 = vadd.f32 %v132, %v211
    %v213 = vpop.f32.mrb[0].mxu0
    %v214 = vadd.f32 %v134, %v213
    %215 = vdwg.mxu0
    %217 = vset.pattern.permute.xlu0 0
    %218 = vperm.xlu0 %217, %v51
    %v219 = vpop.permute.xlu0 %218
    %v221 = vadd.f32 %v212, %v219
    %v222 = vadd.f32 %v214, %v219
    %v225 = vcombine.low %v221, %v222
    %227 = vst [vmem:[#allocation7] sm:$0xff] %v225
    %s228 = scalar_lea.vmem [#allocation2], 8
    %v229 = vld [vmem:[%s228] sm:$0xff]
    %s230 = scalar_lea.vmem [#allocation5], 8
    %v231 = vld [vmem:[%s230] sm:$0xff]
    %v233 = vcombine.high %v231, %v231
    %v234 = vsel %vm60, %v231, 0
    %v236 = vsel %vm60, %v233, 0
    %238 = vmatprep.subr.mxu0 %v236
    %239 = vmatpush1.msra.mxu0 %v234
    %240 = vmatprep.subr.mxu0 0.0
    %241 = vmatpush1.msra.mxu0 0.0
    %242 = vmatprep.subr.mxu0 0.0
    %243 = vmatpush1.msra.mxu0 0.0
    %244 = vmatprep.subr.mxu0 0.0
    %245 = vmatpush1.msra.mxu0 0.0
    %246 = vmatprep.subr.mxu0 0.0
    %247 = vmatpush1.msra.mxu0 0.0
    %248 = vmatprep.subr.mxu0 0.0
    %249 = vmatpush1.msra.mxu0 0.0
    %250 = vmatprep.subr.mxu0 0.0
    %251 = vmatpush1.msra.mxu0 0.0
    %252 = vmatprep.subr.mxu0 0.0
    %253 = vmatpush1.msra.mxu0 0.0
    %254 = vmatprep.subr.mxu0 0.0
    %255 = vmatpush1.msra.mxu0 0.0
    %256 = vmatprep.subr.mxu0 0.0
    %257 = vmatpush1.msra.mxu0 0.0
    %258 = vmatprep.subr.mxu0 0.0
    %259 = vmatpush1.msra.mxu0 0.0
    %260 = vmatprep.subr.mxu0 0.0
    %261 = vmatpush1.msra.mxu0 0.0
    %262 = vmatprep.subr.mxu0 0.0
    %263 = vmatpush1.msra.mxu0 0.0
    %264 = vmatprep.subr.mxu0 0.0
    %265 = vmatpush1.msra.mxu0 0.0
    %266 = vmatprep.subr.mxu0 0.0
    %267 = vmatpush1.msra.mxu0 0.0
    %268 = vmatprep.subr.mxu0 0.0
    %269 = vmatpush1.msra.mxu0 0.0
    %270 = vmatprep.subr.mxu0 0.0
    %271 = vmatpush1.msra.mxu0 0.0
    %272 = vmatprep.subr.mxu0 0.0
    %273 = vmatpush1.msra.mxu0 0.0
    %274 = vmatprep.subr.mxu0 0.0
    %275 = vmatpush1.msra.mxu0 0.0
    %276 = vmatprep.subr.mxu0 0.0
    %277 = vmatpush1.msra.mxu0 0.0
    %278 = vmatprep.subr.mxu0 0.0
    %279 = vmatpush1.msra.mxu0 0.0
    %280 = vmatprep.subr.mxu0 0.0
    %281 = vmatpush1.msra.mxu0 0.0
    %282 = vmatprep.subr.mxu0 0.0
    %283 = vmatpush1.msra.mxu0 0.0
    %284 = vmatprep.subr.mxu0 0.0
    %285 = vmatpush1.msra.mxu0 0.0
    %286 = vmatprep.subr.mxu0 0.0
    %287 = vmatpush1.msra.mxu0 0.0
    %288 = vmatprep.subr.mxu0 0.0
    %289 = vmatpush1.msra.mxu0 0.0
    %290 = vmatprep.subr.mxu0 0.0
    %291 = vmatpush1.msra.mxu0 0.0
    %292 = vmatprep.subr.mxu0 0.0
    %293 = vmatpush1.msra.mxu0 0.0
    %294 = vmatprep.subr.mxu0 0.0
    %295 = vmatpush1.msra.mxu0 0.0
    %296 = vmatprep.subr.mxu0 0.0
    %297 = vmatpush1.msra.mxu0 0.0
    %298 = vmatprep.subr.mxu0 0.0
    %299 = vmatpush1.msra.mxu0 0.0
    %300 = vmatprep.subr.mxu0 0.0
    %301 = vmatpush1.msra.mxu0 0.0
    %302 = vmatprep.mubr.f32.mxu0 0.0
    %303 = vmatmul.mubr.f32.gmra.mrb[0].mxu0 %v58
    %v304 = vpop.f32.mrb[0].mxu0
    %v305 = vadd.f32 0.0, %v304
    %v306 = vpop.f32.mrb[0].mxu0
    %v307 = vadd.f32 0.0, %v306
    %308 = vdwg.mxu0
    %v310 = vcombine.high %v229, %v229
    %v311 = vsel %vm60, %v229, 0
    %v313 = vsel %vm60, %v310, 0
    %315 = vmatprep.subr.mxu0 %v313
    %316 = vmatpush1.msra.mxu0 %v311
    %317 = vmatprep.subr.mxu0 0.0
    %318 = vmatpush1.msra.mxu0 0.0
    %319 = vmatprep.subr.mxu0 0.0
    %320 = vmatpush1.msra.mxu0 0.0
    %321 = vmatprep.subr.mxu0 0.0
    %322 = vmatpush1.msra.mxu0 0.0
    %323 = vmatprep.subr.mxu0 0.0
    %324 = vmatpush1.msra.mxu0 0.0
    %325 = vmatprep.subr.mxu0 0.0
    %326 = vmatpush1.msra.mxu0 0.0
    %327 = vmatprep.subr.mxu0 0.0
    %328 = vmatpush1.msra.mxu0 0.0
    %329 = vmatprep.subr.mxu0 0.0
    %330 = vmatpush1.msra.mxu0 0.0
    %331 = vmatprep.subr.mxu0 0.0
    %332 = vmatpush1.msra.mxu0 0.0
    %333 = vmatprep.subr.mxu0 0.0
    %334 = vmatpush1.msra.mxu0 0.0
    %335 = vmatprep.subr.mxu0 0.0
    %336 = vmatpush1.msra.mxu0 0.0
    %337 = vmatprep.subr.mxu0 0.0
    %338 = vmatpush1.msra.mxu0 0.0
    %339 = vmatprep.subr.mxu0 0.0
    %340 = vmatpush1.msra.mxu0 0.0
    %341 = vmatprep.subr.mxu0 0.0
    %342 = vmatpush1.msra.mxu0 0.0
    %343 = vmatprep.subr.mxu0 0.0
    %344 = vmatpush1.msra.mxu0 0.0
    %345 = vmatprep.subr.mxu0 0.0
    %346 = vmatpush1.msra.mxu0 0.0
    %347 = vmatprep.subr.mxu0 0.0
    %348 = vmatpush1.msra.mxu0 0.0
    %349 = vmatprep.subr.mxu0 0.0
    %350 = vmatpush1.msra.mxu0 0.0
    %351 = vmatprep.subr.mxu0 0.0
    %352 = vmatpush1.msra.mxu0 0.0
    %353 = vmatprep.subr.mxu0 0.0
    %354 = vmatpush1.msra.mxu0 0.0
    %355 = vmatprep.subr.mxu0 0.0
    %356 = vmatpush1.msra.mxu0 0.0
    %357 = vmatprep.subr.mxu0 0.0
    %358 = vmatpush1.msra.mxu0 0.0
    %359 = vmatprep.subr.mxu0 0.0
    %360 = vmatpush1.msra.mxu0 0.0
    %361 = vmatprep.subr.mxu0 0.0
    %362 = vmatpush1.msra.mxu0 0.0
    %363 = vmatprep.subr.mxu0 0.0
    %364 = vmatpush1.msra.mxu0 0.0
    %365 = vmatprep.subr.mxu0 0.0
    %366 = vmatpush1.msra.mxu0 0.0
    %367 = vmatprep.subr.mxu0 0.0
    %368 = vmatpush1.msra.mxu0 0.0
    %369 = vmatprep.subr.mxu0 0.0
    %370 = vmatpush1.msra.mxu0 0.0
    %371 = vmatprep.subr.mxu0 0.0
    %372 = vmatpush1.msra.mxu0 0.0
    %373 = vmatprep.subr.mxu0 0.0
    %374 = vmatpush1.msra.mxu0 0.0
    %375 = vmatprep.subr.mxu0 0.0
    %376 = vmatpush1.msra.mxu0 0.0
    %377 = vmatprep.subr.mxu0 0.0
    %378 = vmatpush1.msra.mxu0 0.0
    %379 = vmatprep.mubr.f32.mxu0 0.0
    %380 = vmatmul.mubr.f32.gmra.mrb[0].mxu0 %v139
    %v381 = vpop.f32.mrb[0].mxu0
    %v382 = vadd.f32 %v305, %v381
    %v383 = vpop.f32.mrb[0].mxu0
    %v384 = vadd.f32 %v307, %v383
    %385 = vdwg.mxu0
    %v386 = vadd.f32 %v382, %v219
    %v387 = vadd.f32 %v384, %v219
    %v390 = vcombine.low %v386, %v387
    %s392 = scalar_lea.vmem [#allocation7], 8
    %393 = vst [vmem:[%s392] sm:$0xff] %v390
    // Predicated region
    $region30: #{tpu_custom_call.1} parent=1 // pred_check
      _
    $region31: #{tpu_custom_call.1} parent=1 // pred_check_branch
      %395 = sbr.rel (0) target = $region33
    $region32: #{tpu_custom_call.1} parent=1 // pred_region
      %s397 = ssub.s32 256, 256
      %398 = vsyncadd [#allocation4], %s397
      %s399 = sshll.u32 [#allocation7], 4
      %s400 = int_to_ptr.vmem [resolvable:$true] %s399
      %405 = dma.vmem_to_hbm [thread:$0]  %s400, 256, %s5, [#allocation4], 128, 128, 8
    $region33: #{tpu_custom_call.1} parent=1 // pred_fallthru
      _
    // Predicated region
    $region34: #{tpu_custom_call.1} parent=1 // pred_check
      _
    $region35: #{tpu_custom_call.1} parent=1 // pred_check_branch
      %407 = sbr.rel (0) target = $region37
    $region36: #{tpu_custom_call.1} parent=1 // pred_region
      %408 = dma.done [#allocation4], 256
    $region37: #{tpu_custom_call.1} parent=1 // pred_fallthru
      _
    %409 = vsyncpa [#allocation3], 1
    %410 = vsyncpa [#allocation6], 1
    %411 = vsyncpa [#allocation4], 1

</llo_original>
